<compile_context>
chip_gen: v6e
topology: v6e:2x2x1
jax: 0.10.0
libtpu: 0.0.40
codegen_flags: <defaults>
</compile_context>

<pallas_src>
from functools import partial

import jax
import jax.numpy as jnp
from jax.experimental import pallas as pl
from jax.experimental.pallas import tpu as pltpu


def _round_up(x, m):
    return (x + m - 1) // m * m


def _cdiv(a, b):
    return -(-a // b)


def _tpu_vmem_bytes():
    """Per-TensorCore VMEM capacity; conservative (v7x, 64 MiB) fallback."""
    try:
        info = pltpu.get_tpu_info()
        cap = getattr(info, "vmem_capacity_bytes", None)
        if cap:
            return int(cap)
    except Exception:
        pass
    return 64 * 1024 * 1024


def _choose_row_tile(B, Ho, per_row_bytes, resident_bytes, budget):
    """Pick the output row-tile height TH.

    Prefers a single tile (the whole-image input block stays resident, so
    extra tiles only add per-grid-step overhead on 1-TC chips); splits when
    B == 1 (so both v7x TensorCores get a grid point) or when the per-tile
    VMEM footprint exceeds the budget.  Split tiles are 8-row aligned
    (sublane constraint on the output block); Ho is padded up to n_rt * TH
    and the surplus rows are sliced off in the wrapper.
    """
    TH = Ho
    if B == 1 and Ho > 8:
        cand = _round_up(_cdiv(Ho, 2), 8)
        if cand < Ho:
            TH = cand
    while TH > 8 and resident_bytes + TH * per_row_bytes > budget:
        TH = _round_up(_cdiv(TH, 2), 8)
    if TH >= Ho:
        return Ho, 1, Ho
    TH = _round_up(TH, 8)
    n_rt = _cdiv(Ho, TH)
    return TH, n_rt, n_rt * TH


def _sepconv_banded_kernel(x_ref, rhs_ref, bias_ref, o_ref, *, TH, K):
    """Small-C path: depthwise taps + pointwise mix folded into K matmuls.

    x_ref   : (1, Hp_pad, Wp*C)  lane-packed padded image (one batch element)
    rhs_ref : (K, Wp*C, Wo*O)    per-row-offset banded (shift x channel-mix)
    bias_ref: (1, Wo*O)          folded dw+pw bias (f32)
    o_ref   : (1, TH, Wo*O)      lane-packed output row tile
    """
    row0 = pl.multiple_of(pl.program_id(1) * TH, TH)
    woo = o_ref.shape[-1]
    acc = jnp.zeros((TH, woo), jnp.float32)
    for dh in range(K):                      # K MXU matmuls, f32 accumulation
        slab = x_ref[0, pl.ds(row0 + dh, TH), :]
        acc = acc + jnp.dot(slab, rhs_ref[dh],
                            preferred_element_type=jnp.float32)
    acc = acc + bias_ref[...]
    o_ref[...] = acc.reshape(1, TH, woo).astype(o_ref.dtype)


def _sepconv_twostage_kernel(x_ref, wd_ref, wp_ref, bias_ref, o_ref, *,
                             TH, Wo, K):
    """Large-C path: VPU depthwise accumulation, then one MXU pointwise dot.

    x_ref   : (1, Hp_pad, Wp, C)  NHWC padded image (one batch element)
    wd_ref  : (K, K, C)           depthwise weights (f32)
    wp_ref  : (C, Opad)           pointwise weights (model dtype)
    bias_ref: (1, Opad)           folded dw+pw bias (f32)
    o_ref   : (1, TH, Wo, Opad)
    """
    C = wd_ref.shape[-1]
    Opad = o_ref.shape[-1]
    row0 = pl.multiple_of(pl.program_id(1) * TH, TH)
    acc = jnp.zeros((TH, Wo, C), jnp.float32)
    for dh in range(K):
        # Convert each dh row-window to f32 once; reused by the K dw shifts.
        rows = x_ref[0, pl.ds(row0 + dh, TH), :, :].astype(jnp.float32)
        for dw in range(K):
            acc = acc + rows[:, dw:dw + Wo, :] * wd_ref[dh, dw, :].reshape(1, 1, C)
    # TODO(synk): software-pipeline the VPU tap loop against the MXU matmul
    # over TH sub-chunks so the two units overlap (review suggestion).
    lhs = acc.reshape(TH * Wo, C).astype(wp_ref.dtype)
    y = jnp.dot(lhs, wp_ref[...], preferred_element_type=jnp.float32)
    y = y + bias_ref[...]
    o_ref[...] = y.reshape(1, TH, Wo, Opad).astype(o_ref.dtype)


def _build_banded_rhs(wd32, wp32, Wp, Wo, K, C, O):
    """rhs[dh, w_in*C + c, w_out*O + o] =
           wd[dh, w_in - w_out, c] * wp[c, o]   if 0 <= w_in - w_out < K else 0
    so that   y[h, w_out*O + o] = sum_dh  x_packed_row[h + dh] @ rhs[dh]."""
    wcomb = wd32[:, :, :, None] * wp32[None, None, :, :]        # (K, K, C, O)
    dw = jnp.arange(Wp)[:, None] - jnp.arange(Wo)[None, :]      # (Wp, Wo)
    valid = (dw >= 0) & (dw < K)
    g = wcomb[:, jnp.clip(dw, 0, K - 1), :, :]                  # (K, Wp, Wo, C, O)
    g = jnp.where(valid[None, :, :, None, None], g, 0.0)
    g = jnp.transpose(g, (0, 1, 3, 2, 4))                       # (K, Wp, C, Wo, O)
    return g.reshape(K, Wp * C, Wo * O)


@partial(jax.jit, static_argnames=("kernel_size", "stride", "padding"))
def separable_conv2d(x_nchw, dw_weight, dw_bias, pw_weight, pw_bias, *,
                     kernel_size=3, stride=1, padding=1):
    """SeparableConv2d.forward for NCHW input.

    dw_weight: (C, 1, K, K), dw_bias: (C,)   -- nn.Conv2d(C, C, K, groups=C)
    pw_weight: (O, C, 1, 1), pw_bias: (O,)   -- nn.Conv2d(C, O, 1)
    """
    # TODO(synk): only stride=1 (the module's default) is implemented.
    assert stride == 1, "only stride=1 is supported"
    B, C, H, W = x_nchw.shape
    K = kernel_size
    O = pw_weight.shape[0]
    dtype = x_nchw.dtype
    itemsize = jnp.dtype(dtype).itemsize

    Hp, Wp = H + 2 * padding, W + 2 * padding
    Ho, Wo = Hp - K + 1, Wp - K + 1

    # Parameters in f32; fold the depthwise bias into the pointwise bias:
    #   pw(dw(x) + bd) = pw(dw(x)) + bd @ Wpw + bpw
    wd32 = jnp.transpose(dw_weight[:, 0, :, :], (1, 2, 0)).astype(jnp.float32)  # (K,K,C)
    wp32 = jnp.transpose(pw_weight[:, :, 0, 0], (1, 0)).astype(jnp.float32)     # (C,O)
    bias_eff = pw_bias.astype(jnp.float32) + dw_bias.astype(jnp.float32) @ wp32  # (O,)

    # Generation-aware VMEM budget (v5e/v6e: 128 MiB, v7x: 64 MiB per TC).
    vmem_cap = _tpu_vmem_bytes()
    vmem_limit = int(max(32 * 2**20, min(vmem_cap * 3 // 4, 100 * 2**20)))
    budget = int(vmem_limit * 0.8)

    # NCHW -> NHWC (padding applied per path below; fused into one pass by XLA).
    x = jnp.transpose(x_nchw, (0, 2, 3, 1))

    WoO = Wo * O
    rhs_bytes = K * (Wp * C) * WoO * itemsize
    # Small-C path unless the banded weights get too big / C already lane-dense.
    # (Crossover point ~C<=64; re-tune towards 16-32 on v5e.)
    use_banded = (C <= 64) and (rhs_bytes <= 8 * 2**20)

    if use_banded:
        # VMEM accounting: double-buffered input + resident banded weights are
        # per-grid-constant; the output block (x2) and the f32 accumulator
        # scale with the row-tile height.
        resident = 2 * (Ho + K + 8) * (Wp * C) * itemsize + 2 * rhs_bytes
        per_row = 2 * WoO * itemsize + WoO * 4
        TH, n_rt, Ho_pad = _choose_row_tile(B, Ho, per_row, resident, budget)
        Hp_pad = Ho_pad + K - 1

        xp = jnp.pad(x, ((0, 0), (padding, Hp_pad - H - padding),
                         (padding, padding), (0, 0)))
        xp = xp.reshape(B, Hp_pad, Wp * C)                 # lane-packed (W, C)

        rhs = _build_banded_rhs(wd32, wp32, Wp, Wo, K, C, O).astype(dtype)
        bias_packed = jnp.tile(bias_eff, Wo).reshape(1, WoO)   # f32, idx = w*O + o

        out_packed = pl.pallas_call(
            partial(_sepconv_banded_kernel, TH=TH, K=K),
            out_shape=jax.ShapeDtypeStruct((B, Ho_pad, WoO), dtype),
            grid=(B, n_rt),
            in_specs=[pl.BlockSpec((1, Hp_pad, Wp * C), lambda b, r: (b, 0, 0)),
                      pl.BlockSpec((K, Wp * C, WoO), lambda b, r: (0, 0, 0)),
                      pl.BlockSpec((1, WoO), lambda b, r: (0, 0))],
            out_specs=pl.BlockSpec((1, TH, WoO), lambda b, r: (b, r, 0)),
            compiler_params=pltpu.CompilerParams(
                dimension_semantics=("parallel", "parallel"),
                vmem_limit_bytes=vmem_limit),
        )(xp, rhs, bias_packed)

        out = out_packed[:, :Ho, :].reshape(B, Ho, Wo, O)
        return jnp.transpose(out, (0, 3, 1, 2))

    # ---- large-C two-stage path --------------------------------------------
    Opad = _round_up(O, 128)                                   # lane-dense stores
    wp_pad = jnp.pad(wp32, ((0, 0), (0, Opad - O))).astype(dtype)   # (C, Opad)
    bias_pad = jnp.pad(bias_eff, (0, Opad - O)).reshape(1, Opad)    # f32

    resident = (2 * (Ho + K + 8) * Wp * C * itemsize
                + 2 * (K * K * C * 4 + C * Opad * itemsize))
    per_row = 2 * Wo * Opad * itemsize + Wo * Opad * 4 + Wo * C * 4
    TH, n_rt, Ho_pad = _choose_row_tile(B, Ho, per_row, resident, budget)
    Hp_pad = Ho_pad + K - 1
    # TODO(synk): for feature maps too large for whole-image VMEM residency,
    # switch to manual halo DMA (memory_space=pl.ANY + pltpu.make_async_copy).

    xp = jnp.pad(x, ((0, 0), (padding, Hp_pad - H - padding),
                     (padding, padding), (0, 0)))

    out_nhwc = pl.pallas_call(
        partial(_sepconv_twostage_kernel, TH=TH, Wo=Wo, K=K),
        out_shape=jax.ShapeDtypeStruct((B, Ho_pad, Wo, Opad), dtype),
        grid=(B, n_rt),
        in_specs=[pl.BlockSpec((1, Hp_pad, Wp, C), lambda b, r: (b, 0, 0, 0)),
                  pl.BlockSpec((K, K, C), lambda b, r: (0, 0, 0)),
                  pl.BlockSpec((C, Opad), lambda b, r: (0, 0)),
                  pl.BlockSpec((1, Opad), lambda b, r: (0, 0))],
        out_specs=pl.BlockSpec((1, TH, Wo, Opad), lambda b, r: (b, r, 0, 0)),
        compiler_params=pltpu.CompilerParams(
            dimension_semantics=("parallel", "parallel"),
            vmem_limit_bytes=vmem_limit),
    )(xp, wd32, wp_pad, bias_pad)

    out = out_nhwc[:, :Ho, :, :O]
    return jnp.transpose(out, (0, 3, 1, 2))


if __name__ == "__main__":
    B, C, H, W, O, K = 2, 4, 16, 16, 8, 3

    key = jax.random.PRNGKey(0)
    k1, k2, k3, k4, k5 = jax.random.split(key, 5)
    x = jax.random.normal(k1, (B, C, H, W), jnp.float32)
    dw_w = 0.1 * jax.random.normal(k2, (C, 1, K, K), jnp.float32)   # depthwise weight
    dw_b = 0.1 * jax.random.normal(k3, (C,), jnp.float32)           # depthwise bias
    pw_w = 0.1 * jax.random.normal(k4, (O, C, 1, 1), jnp.float32)   # pointwise weight
    pw_b = 0.1 * jax.random.normal(k5, (O,), jnp.float32)           # pointwise bias

    y = jax.block_until_ready(separable_conv2d(x, dw_w, dw_b, pw_w, pw_b))
    assert y.shape == (B, O, H, W), y.shape

    # Pure-JAX reference (same semantics as the PyTorch module).
    dw_out = jax.lax.conv_general_dilated(
        x, dw_w, window_strides=(1, 1), padding=((1, 1), (1, 1)),
        dimension_numbers=("NCHW", "OIHW", "NCHW"), feature_group_count=C,
        precision=jax.lax.Precision.HIGHEST) + dw_b[None, :, None, None]
    ref = jax.lax.conv_general_dilated(
        dw_out, pw_w, window_strides=(1, 1), padding=((0, 0), (0, 0)),
        dimension_numbers=("NCHW", "OIHW", "NCHW"),
        precision=jax.lax.Precision.HIGHEST) + pw_b[None, :, None, None]

    err = float(jnp.max(jnp.abs(y - ref)))
    assert err < 5e-3, f"max abs error vs reference: {err}"
    print("KERNEL_OK")
</pallas_src>

<mosaic_0001>
module attributes {stable_mosaic.version = 11 : i64} {
  func.func @_sepconv_banded_kernel(%arg0: i32, %arg1: i32, %arg2: memref<1x18x72xf32, #tpu.memory_space<vmem>>, %arg3: memref<3x72x128xf32, #tpu.memory_space<vmem>>, %arg4: memref<1x128xf32, #tpu.memory_space<vmem>>, %arg5: memref<1x16x128xf32, #tpu.memory_space<vmem>>) attributes {dimension_semantics = [#tpu.dimension_semantics<parallel>, #tpu.dimension_semantics<parallel>], iteration_bounds = array<i64: 2, 1>, scalar_prefetch = 0 : i64, scratch_operands = 0 : i64, tpu.core_type = #tpu.core_type<tc>, window_params = [{transform_indices = @transform_0, window_bounds = array<i64: 1, 18, 72>}, {pipeline_mode = #tpu.pipeline_mode<synchronous>, transform_indices = @transform_1, window_bounds = array<i64: 3, 72, 128>}, {pipeline_mode = #tpu.pipeline_mode<synchronous>, transform_indices = @transform_2, window_bounds = array<i64: 1, 128>}, {transform_indices = @transform_3, window_bounds = array<i64: 1, 16, 128>}]} {
    %c16_i32 = arith.constant 16 : i32
    %0 = arith.muli %arg1, %c16_i32 : i32
    %1 = tpu.assume_multiple %0, 16 : i32
    %cst = arith.constant 0.000000e+00 : f32
    %2 = vector.broadcast %cst : f32 to vector<16x128xf32>
    %c0_i32 = arith.constant 0 : i32
    %3 = arith.addi %1, %c0_i32 : i32
    %c0 = arith.constant 0 : index
    %4 = arith.index_cast %3 : i32 to index
    %c0_0 = arith.constant 0 : index
    %5 = vector.load %arg2[%c0, %4, %c0_0] : memref<1x18x72xf32, #tpu.memory_space<vmem>>, vector<1x16x72xf32>
    %6 = vector.shape_cast %5 : vector<1x16x72xf32> to vector<16x72xf32>
    %c0_1 = arith.constant 0 : index
    %c0_2 = arith.constant 0 : index
    %c0_3 = arith.constant 0 : index
    %7 = vector.load %arg3[%c0_1, %c0_2, %c0_3] : memref<3x72x128xf32, #tpu.memory_space<vmem>>, vector<1x72x128xf32>
    %8 = vector.shape_cast %7 : vector<1x72x128xf32> to vector<72x128xf32>
    %cst_4 = arith.constant dense<0.000000e+00> : vector<16x128xf32>
    %9 = tpu.matmul %6, %8, %cst_4 {dimension_numbers = #tpu.dot_dimension_numbers<[1], [0], [0], [1], [0, 0, 1, 1], [], []>} : vector<16x72xf32>, vector<72x128xf32>, vector<16x128xf32> -> vector<16x128xf32>
    %10 = arith.addf %2, %9 : vector<16x128xf32>
    %c1_i32 = arith.constant 1 : i32
    %11 = arith.addi %1, %c1_i32 : i32
    %c0_5 = arith.constant 0 : index
    %12 = arith.index_cast %11 : i32 to index
    %c0_6 = arith.constant 0 : index
    %13 = vector.load %arg2[%c0_5, %12, %c0_6] : memref<1x18x72xf32, #tpu.memory_space<vmem>>, vector<1x16x72xf32>
    %14 = vector.shape_cast %13 : vector<1x16x72xf32> to vector<16x72xf32>
    %c1 = arith.constant 1 : index
    %c0_7 = arith.constant 0 : index
    %c0_8 = arith.constant 0 : index
    %15 = vector.load %arg3[%c1, %c0_7, %c0_8] : memref<3x72x128xf32, #tpu.memory_space<vmem>>, vector<1x72x128xf32>
    %16 = vector.shape_cast %15 : vector<1x72x128xf32> to vector<72x128xf32>
    %cst_9 = arith.constant dense<0.000000e+00> : vector<16x128xf32>
    %17 = tpu.matmul %14, %16, %cst_9 {dimension_numbers = #tpu.dot_dimension_numbers<[1], [0], [0], [1], [0, 0, 1, 1], [], []>} : vector<16x72xf32>, vector<72x128xf32>, vector<16x128xf32> -> vector<16x128xf32>
    %18 = arith.addf %10, %17 : vector<16x128xf32>
    %c2_i32 = arith.constant 2 : i32
    %19 = arith.addi %1, %c2_i32 : i32
    %c0_10 = arith.constant 0 : index
    %20 = arith.index_cast %19 : i32 to index
    %c0_11 = arith.constant 0 : index
    %21 = vector.load %arg2[%c0_10, %20, %c0_11] : memref<1x18x72xf32, #tpu.memory_space<vmem>>, vector<1x16x72xf32>
    %22 = vector.shape_cast %21 : vector<1x16x72xf32> to vector<16x72xf32>
    %c2 = arith.constant 2 : index
    %c0_12 = arith.constant 0 : index
    %c0_13 = arith.constant 0 : index
    %23 = vector.load %arg3[%c2, %c0_12, %c0_13] : memref<3x72x128xf32, #tpu.memory_space<vmem>>, vector<1x72x128xf32>
    %24 = vector.shape_cast %23 : vector<1x72x128xf32> to vector<72x128xf32>
    %cst_14 = arith.constant dense<0.000000e+00> : vector<16x128xf32>
    %25 = tpu.matmul %22, %24, %cst_14 {dimension_numbers = #tpu.dot_dimension_numbers<[1], [0], [0], [1], [0, 0, 1, 1], [], []>} : vector<16x72xf32>, vector<72x128xf32>, vector<16x128xf32> -> vector<16x128xf32>
    %26 = arith.addf %18, %25 : vector<16x128xf32>
    %c0_15 = arith.constant 0 : index
    %c0_16 = arith.constant 0 : index
    %27 = vector.load %arg4[%c0_15, %c0_16] : memref<1x128xf32, #tpu.memory_space<vmem>>, vector<1x128xf32>
    %28 = vector.broadcast %27 : vector<1x128xf32> to vector<16x128xf32>
    %29 = arith.addf %26, %28 : vector<16x128xf32>
    %30 = vector.shape_cast %29 : vector<16x128xf32> to vector<1x16x128xf32>
    %c0_17 = arith.constant 0 : index
    %c0_18 = arith.constant 0 : index
    %c0_19 = arith.constant 0 : index
    %31 = vector.load %arg5[%c0_17, %c0_18, %c0_19] : memref<1x16x128xf32, #tpu.memory_space<vmem>>, vector<1x16x128xf32>
    tpu.vector_store %arg5[%c0_17, %c0_18, %c0_19], %30 {strides = array<i32>} : memref<1x16x128xf32, #tpu.memory_space<vmem>>, vector<1x16x128xf32>,
    return
  }
  func.func @transform_0(%arg0: i32, %arg1: i32) -> (i32, i32, i32) {
    %c0_i32 = arith.constant 0 : i32
    %c0_i32_0 = arith.constant 0 : i32
    %c0_i32_1 = arith.constant 0 : i32
    return %arg0, %c0_i32, %c0_i32_0 : i32, i32, i32
  }
  func.func @transform_1(%arg0: i32, %arg1: i32) -> (i32, i32, i32) {
    %c0_i32 = arith.constant 0 : i32
    %c0_i32_0 = arith.constant 0 : i32
    %c0_i32_1 = arith.constant 0 : i32
    %c0_i32_2 = arith.constant 0 : i32
    return %c0_i32, %c0_i32_0, %c0_i32_1 : i32, i32, i32
  }
  func.func @transform_2(%arg0: i32, %arg1: i32) -> (i32, i32) {
    %c0_i32 = arith.constant 0 : i32
    %c0_i32_0 = arith.constant 0 : i32
    %c0_i32_1 = arith.constant 0 : i32
    return %c0_i32, %c0_i32_0 : i32, i32
  }
  func.func @transform_3(%arg0: i32, %arg1: i32) -> (i32, i32, i32) {
    %c0_i32 = arith.constant 0 : i32
    %c0_i32_0 = arith.constant 0 : i32
    return %arg0, %arg1, %c0_i32 : i32, i32, i32
  }
}

</mosaic_0001>

<llo_original>
// kernel: tile.8
$region0: #{tile.8}
  #allocation0 [shape = 's32[1]{0}', space=sflag, size = 0x4, scoped, tag = 'scoped memory for tile.8']
  %s0 = inlined_call_operand.vmem [shape: f32[8], index: 0, kind: input, shape index: {}]
  %s1 = inlined_call_operand.vmem [shape: f32[16,8], index: 1, kind: output, shape index: {}]
  // Predicated region
  $region2: #{tile.8} parent=0 // pred_check
    _
  $region3: #{tile.8} parent=0 // pred_check_branch
    %3 = sbr.rel (0) target = $region5
  $region4: #{tile.8} parent=0 // pred_region
    _
  $region5: #{tile.8} parent=0 // pred_fallthru
    _
  %v4 = vld [vmem:[%s0] ss:$0 sm:$0xff]
  %5 = vst [vmem:[%s1] sm:$0xff] %v4
  %s6 = scalar_lea.vmem %s1, 8
  %7 = vst [vmem:[%s6] sm:$0xff] %v4

// kernel: tile.9
$region0: #{tile.9}
  %s0 = inlined_call_operand.vmem [shape: f32[16,8], index: 0, kind: input, shape index: {}]
  %s1 = inlined_call_operand.vmem [shape: f32[1,128], index: 1, kind: output, shape index: {}]
  $region1: #{tile.9} parent=0
    #allocation0 [shape = 'u8[4096]{0}', space=vmem, size = 0x1000, scoped, tag = 'scoped mem for output reshape']
    %v2 = vld [vmem:[%s0] sm:$0x1]
    %vm3 = vcmask 64512
    %4 = vst.msk [vmem:[#allocation0] sm:$0x1] %vm3, %v2
    %s5 = scalar_lea.vmem %s0, 15
    %v6 = vld [vmem:[%s5] sm:$0x1]
    %7 = vrot.lane.b32.xlu0 %v6, 120
    %v8 = vpop.permute.xlu0 %7
    %vm9 = vcmask 1048512
    %10 = vst.msk [vmem:[#allocation0] sm:$0x1] %vm9, %v8
    %s11 = scalar_lea.vmem %s0, 14
    %v12 = vld [vmem:[%s11] sm:$0x1]
    %13 = vrot.lane.b32.xlu0 %v12, 112
    %v14 = vpop.permute.xlu0 %13
    %vm15 = vcmask 982912
    %16 = vst.msk [vmem:[#allocation0] sm:$0x1] %vm15, %v14
    %s17 = scalar_lea.vmem %s0, 13
    %v18 = vld [vmem:[%s17] sm:$0x1]
    %19 = vrot.lane.b32.xlu0 %v18, 104
    %v20 = vpop.permute.xlu0 %19
    %vm21 = vcmask 917312
    %22 = vst.msk [vmem:[#allocation0] sm:$0x1] %vm21, %v20
    %s23 = scalar_lea.vmem %s0, 12
    %v24 = vld [vmem:[%s23] sm:$0x1]
    %25 = vrot.lane.b32.xlu0 %v24, 96
    %v26 = vpop.permute.xlu0 %25
    %vm27 = vcmask 851712
    %28 = vst.msk [vmem:[#allocation0] sm:$0x1] %vm27, %v26
    %s29 = scalar_lea.vmem %s0, 11
    %v30 = vld [vmem:[%s29] sm:$0x1]
    %31 = vrot.lane.b32.xlu0 %v30, 88
    %v32 = vpop.permute.xlu0 %31
    %vm33 = vcmask 786112
    %34 = vst.msk [vmem:[#allocation0] sm:$0x1] %vm33, %v32
    %s35 = scalar_lea.vmem %s0, 10
    %v36 = vld [vmem:[%s35] sm:$0x1]
    %37 = vrot.lane.b32.xlu0 %v36, 80
    %v38 = vpop.permute.xlu0 %37
    %vm39 = vcmask 720512
    %40 = vst.msk [vmem:[#allocation0] sm:$0x1] %vm39, %v38
    %s41 = scalar_lea.vmem %s0, 9
    %v42 = vld [vmem:[%s41] sm:$0x1]
    %43 = vrot.lane.b32.xlu0 %v42, 72
    %v44 = vpop.permute.xlu0 %43
    %vm45 = vcmask 654912
    %46 = vst.msk [vmem:[#allocation0] sm:$0x1] %vm45, %v44
    %s47 = scalar_lea.vmem %s0, 8
    %v48 = vld [vmem:[%s47] sm:$0x1]
    %49 = vrot.lane.b32.xlu0 %v48, 64
    %v50 = vpop.permute.xlu0 %49
    %vm51 = vcmask 589312
    %52 = vst.msk [vmem:[#allocation0] sm:$0x1] %vm51, %v50
    %s53 = scalar_lea.vmem %s0, 7
    %v54 = vld [vmem:[%s53] sm:$0x1]
    %55 = vrot.lane.b32.xlu0 %v54, 56
    %v56 = vpop.permute.xlu0 %55
    %vm57 = vcmask 523712
    %58 = vst.msk [vmem:[#allocation0] sm:$0x1] %vm57, %v56
    %s59 = scalar_lea.vmem %s0, 6
    %v60 = vld [vmem:[%s59] sm:$0x1]
    %61 = vrot.lane.b32.xlu0 %v60, 48
    %v62 = vpop.permute.xlu0 %61
    %vm63 = vcmask 458112
    %64 = vst.msk [vmem:[#allocation0] sm:$0x1] %vm63, %v62
    %s65 = scalar_lea.vmem %s0, 5
    %v66 = vld [vmem:[%s65] sm:$0x1]
    %67 = vrot.lane.b32.xlu0 %v66, 40
    %v68 = vpop.permute.xlu0 %67
    %vm69 = vcmask 392512
    %70 = vst.msk [vmem:[#allocation0] sm:$0x1] %vm69, %v68
    %s71 = scalar_lea.vmem %s0, 4
    %v72 = vld [vmem:[%s71] sm:$0x1]
    %73 = vrot.lane.b32.xlu0 %v72, 32
    %v74 = vpop.permute.xlu0 %73
    %vm75 = vcmask 326912
    %76 = vst.msk [vmem:[#allocation0] sm:$0x1] %vm75, %v74
    %s77 = scalar_lea.vmem %s0, 3
    %v78 = vld [vmem:[%s77] sm:$0x1]
    %79 = vrot.lane.b32.xlu0 %v78, 24
    %v80 = vpop.permute.xlu0 %79
    %vm81 = vcmask 261312
    %82 = vst.msk [vmem:[#allocation0] sm:$0x1] %vm81, %v80
    %s83 = scalar_lea.vmem %s0, 2
    %v84 = vld [vmem:[%s83] sm:$0x1]
    %85 = vrot.lane.b32.xlu0 %v84, 16
    %v86 = vpop.permute.xlu0 %85
    %vm87 = vcmask 195712
    %88 = vst.msk [vmem:[#allocation0] sm:$0x1] %vm87, %v86
    %s89 = scalar_lea.vmem %s0, 1
    %v90 = vld [vmem:[%s89] sm:$0x1]
    %91 = vrot.lane.b32.xlu0 %v90, 8
    %v92 = vpop.permute.xlu0 %91
    %vm93 = vcmask 130112
    %94 = vst.msk [vmem:[#allocation0] sm:$0x1] %vm93, %v92
    %s96 = sshll.u32 1, 1
    %s97 = ssub.s32 %s96, 1
    %v99 = vld [vmem:[#allocation0] sm:%s97]
    %s100 = sshll.u32 1, 1
    %s101 = ssub.s32 %s100, 1
    %102 = vst [vmem:[%s1] sm:%s101] %v99

// kernel: separable_conv2d.1
$region0: #{separable_conv2d.1}
  #allocation0 [shape = 'u32[]', space=smem, size = 0x4, offset = 0x4, fixed_abs, tag = 'smem constant byte address 0x4 - core index']
  #allocation1 [shape = 'u32[144,128]{1,0:T(1,128)}', space=vmem, size = 0x12000, scoped, tag = 'internal scratch']
  %s0 = inlined_call_operand.vmem [shape: f32[2,18,72], index: 0, kind: input, shape index: {}]
  %s1 = inlined_call_operand.vmem [shape: f32[3,72,128], index: 1, kind: input, shape index: {}]
  %s2 = inlined_call_operand.vmem [shape: f32[1,128], index: 2, kind: input, shape index: {}]
  %s3 = inlined_call_operand.vmem [shape: f32[2,16,128], index: 3, kind: output, shape index: {}]
  %s4 = sld [smem:[#allocation0]]
  $region45: #{separable_conv2d.1} parent=0
    _
  %s6 = ssub.s32 1, %s4
  %s7 = scalar_select 0, %s6, %s4
  loop: start=0, step=1, limit=4
  $region2: #{separable_conv2d.1} parent=0 // loop_pre_header
    _
  $region3: #{separable_conv2d.1} parent=0 // loop_header
    %s9 = sphi 0, %s13
    %p10 = scmp.ge.s32.totalorder %s9, 4
    %s16 = sphi 0, %s28
    %s17 = sphi 0, %s24
    %s18 = sphi 0, %s16
    %s19 = sphi 0, %s17
    %s20 = sphi 0, %s18
    %s21 = sphi 0, %s19
    %s31 = sphi 0, %s33
    %s34 = sphi 0, %s31
    %s35 = sphi 0, %s34
    %s51 = sphi 0, %s35
    %s55 = sphi 0, %s55
    %s57 = sphi 0, %s55
    %s58 = sphi 0, %s57
    %s72 = sphi 0, %s58
    %s76 = sphi 0, %s76
    %s78 = sphi 0, %s76
    %s79 = sphi 0, %s78
    %s93 = sphi 0, %s79
    %s101 = sphi 0, %s103
    %s104 = sphi 0, %s101
    %s105 = sphi 0, %s104
    %s121 = sphi 0, %s105
  $region4: #{separable_conv2d.1} parent=0 // loop_header_branch
    %12 = sbr.rel (%p10) target = $region8
  $region5: #{separable_conv2d.1} parent=0 // loop_body
    %s14 = ssub.s32 %s9, 1
    %s15 = ssub.s32 %s9, 2
    %s22 = sadd.s32 1, %s17
    %p23 = scmp.ge.s32.totalorder %s22, 1
    %s24 = scalar_select %p23, 0, %s22
    %s25 = sadd.s32 1, %s16
    %s26 = scalar_select %p23, %s25, %s16
    %p27 = scmp.ge.s32.totalorder %s26, 2
    %s28 = scalar_select %p27, 0, %s26
    %s29 = ssub.s32 %s16, %s28
    %p30 = scmp.eq.s32.totalorder %s29, 0
    %s32 = sadd.s32 %s31, 1
    %s33 = scalar_select %p30, %s31, %s32
    %p36 = pneg %p30
    %p37 = scmp.eq.s32.totalorder %s9, 1
    %p38 = por %p36, %p37
    %p39 = scmp.ne.s32.totalorder %s31, %s34
    %p40 = scmp.eq.s32.totalorder %s9, 0
    %p41 = por %p39, %p40
    %p42 = scmp.ne.s32.totalorder %s31, %s34
    %p43 = scmp.eq.s32.totalorder %s14, 1
    %p44 = por %p42, %p43
    %p45 = scmp.ne.s32.totalorder %s34, %s35
    %p46 = scmp.eq.s32.totalorder %s14, 0
    %p47 = por %p45, %p46
    %p48 = scmp.ne.s32.totalorder %s34, %s35
    %p49 = scmp.eq.s32.totalorder %s15, 1
    %p50 = por %p48, %p49
    %p52 = scmp.ne.s32.totalorder %s35, %s51
    %p53 = scmp.eq.s32.totalorder %s15, 0
    %p54 = por %p52, %p53
    %s56 = sadd.s32 %s55, 1
    %p59 = scmp.eq.s32.totalorder %s9, 1
    %p60 = scmp.ne.s32.totalorder %s55, %s57
    %p61 = scmp.eq.s32.totalorder %s9, 0
    %p62 = por %p60, %p61
    %p63 = scmp.ne.s32.totalorder %s55, %s57
    %p64 = scmp.eq.s32.totalorder %s14, 1
    %p65 = por %p63, %p64
    %p66 = scmp.ne.s32.totalorder %s57, %s58
    %p67 = scmp.eq.s32.totalorder %s14, 0
    %p68 = por %p66, %p67
    %p69 = scmp.ne.s32.totalorder %s57, %s58
    %p70 = scmp.eq.s32.totalorder %s15, 1
    %p71 = por %p69, %p70
    %p73 = scmp.ne.s32.totalorder %s58, %s72
    %p74 = scmp.eq.s32.totalorder %s15, 0
    %p75 = por %p73, %p74
    %s77 = sadd.s32 %s76, 1
    %p80 = scmp.eq.s32.totalorder %s9, 1
    %p81 = scmp.ne.s32.totalorder %s76, %s78
    %p82 = scmp.eq.s32.totalorder %s9, 0
    %p83 = por %p81, %p82
    %p84 = scmp.ne.s32.totalorder %s76, %s78
    %p85 = scmp.eq.s32.totalorder %s14, 1
    %p86 = por %p84, %p85
    %p87 = scmp.ne.s32.totalorder %s78, %s79
    %p88 = scmp.eq.s32.totalorder %s14, 0
    %p89 = por %p87, %p88
    %p90 = scmp.ne.s32.totalorder %s78, %s79
    %p91 = scmp.eq.s32.totalorder %s15, 1
    %p92 = por %p90, %p91
    %p94 = scmp.ne.s32.totalorder %s79, %s93
    %p95 = scmp.eq.s32.totalorder %s15, 0
    %p96 = por %p94, %p95
    %s97 = ssub.s32 %s16, %s28
    %s98 = ssub.s32 %s17, %s24
    %s99 = sor.u32 %s97, %s98
    %p100 = scmp.eq.s32.totalorder %s99, 0
    %s102 = sadd.s32 %s101, 1
    %s103 = scalar_select %p100, %s101, %s102
    %p106 = pneg %p100
    %p107 = scmp.eq.s32.totalorder %s9, 1
    %p108 = por %p106, %p107
    %p109 = scmp.ne.s32.totalorder %s101, %s104
    %p110 = scmp.eq.s32.totalorder %s9, 0
    %p111 = por %p109, %p110
    %p112 = scmp.ne.s32.totalorder %s101, %s104
    %p113 = scmp.eq.s32.totalorder %s14, 1
    %p114 = por %p112, %p113
    %p115 = scmp.ne.s32.totalorder %s104, %s105
    %p116 = scmp.eq.s32.totalorder %s14, 0
    %p117 = por %p115, %p116
    %p118 = scmp.ne.s32.totalorder %s104, %s105
    %p119 = scmp.eq.s32.totalorder %s15, 1
    %p120 = por %p118, %p119
    %p122 = scmp.ne.s32.totalorder %s105, %s121
    %p123 = scmp.eq.s32.totalorder %s15, 0
    %p124 = por %p122, %p123
    %p125 = scmp.le.s32.totalorder 1, %s9
    %p126 = scmp.lt.s32.totalorder %s9, 3
    %p127 = pnand %p125, %p126
    %p128 = pneg %p127
    // Predicated region
    $region9: #{separable_conv2d.1} parent=5 // pred_check
      _
    $region10: #{separable_conv2d.1} parent=5 // pred_check_branch
      %130 = sbr.rel (%p127) target = $region12
    $region11: #{separable_conv2d.1} parent=5 // pred_region
      %s131 = ssub.s32 %s9, 1
      // Predicated region
      $region13: #{separable_conv2d.1} parent=11 // pred_check
        %p132 = pneg %p68
      $region14: #{separable_conv2d.1} parent=11 // pred_check_branch
        %134 = sbr.rel (%p132) target = $region16
      $region15: #{separable_conv2d.1} parent=11 // pred_region
        _
      $region16: #{separable_conv2d.1} parent=11 // pred_fallthru
        _
      // Predicated region
      $region17: #{separable_conv2d.1} parent=11 // pred_check
        %p135 = pneg %p89
      $region18: #{separable_conv2d.1} parent=11 // pred_check_branch
        %137 = sbr.rel (%p135) target = $region20
      $region19: #{separable_conv2d.1} parent=11 // pred_region
        _
      $region20: #{separable_conv2d.1} parent=11 // pred_fallthru
        _
    $region12: #{separable_conv2d.1} parent=5 // pred_fallthru
      _
    %p138 = scmp.lt.s32.totalorder %s9, 2
    // Predicated region
    $region21: #{separable_conv2d.1} parent=5 // pred_check
      %p139 = pneg %p138
    $region22: #{separable_conv2d.1} parent=5 // pred_check_branch
      %141 = sbr.rel (%p139) target = $region24
    $region23: #{separable_conv2d.1} parent=5 // pred_region
      // Predicated region
      $region25: #{separable_conv2d.1} parent=23 // pred_check
        %p142 = pneg %p41
      $region26: #{separable_conv2d.1} parent=23 // pred_check_branch
        %144 = sbr.rel (%p142) target = $region28
      $region27: #{separable_conv2d.1} parent=23 // pred_region
        %p145 = scmp.lt.s32.totalorder %s16, 1
        %s146 = scalar_select %p145, %s16, 1
        %s147 = smul.addr %s146, 3
        %s148 = smul.addr %s147, 8
        %s149 = scalar_lea.vmem %s0, %s148
      $region28: #{separable_conv2d.1} parent=23 // pred_fallthru
        _
    $region24: #{separable_conv2d.1} parent=5 // pred_fallthru
      _
    %p150 = scmp.le.s32.totalorder 1, %s9
    %p151 = scmp.lt.s32.totalorder %s9, 3
    %p152 = pnand %p150, %p151
    %p153 = pneg %p152
    // Predicated region
    $region29: #{separable_conv2d.1} parent=5 // pred_check
      _
    $region30: #{separable_conv2d.1} parent=5 // pred_check_branch
      %155 = sbr.rel (%p152) target = $region32
    $region31: #{separable_conv2d.1} parent=5 // pred_region
      %s156 = ssub.s32 %s9, 1
      %p157 = scmp.lt.s32.totalorder %s18, 1
      %s158 = scalar_select %p157, %s18, 1
      %s159 = smul.addr %s158, 3
      %s160 = smul.addr %s159, 8
      %s161 = scalar_lea.vmem %s0, %s160
      %p162 = pneg %p47
      %p163 = pneg %p44
      %p164 = pneg %p68
      %p165 = pneg %p65
      %p166 = pneg %p89
      %p167 = pneg %p86
      %p168 = pneg %p117
      %p169 = pneg %p114
      %s170 = smul.u32 2, %s19
      %p171 = scmp.lt.s32.totalorder %s18, 1
      %s172 = scalar_select %p171, %s18, 1
      %p173 = scmp.lt.s32.totalorder %s170, 1
      %s174 = scalar_select %p173, %s170, 1
      %s175 = smul.addr %s172, 2
      %s176 = sadd.s32 %s174, %s175
      %s177 = smul.addr %s176, 8
      %s178 = scalar_lea.vmem %s3, %s177
      %p179 = scmp.lt.s32.totalorder %s18, 1
      %s180 = scalar_select %p179, %s18, 1
      %s181 = smul.addr %s180, 3
      %s182 = smul.addr %s181, 8
      %s183 = scalar_lea.vmem %s0, %s182
      %s184 = smul.u32 2, %s19
      %p185 = scmp.lt.s32.totalorder %s18, 1
      %s186 = scalar_select %p185, %s18, 1
      %p187 = scmp.lt.s32.totalorder %s184, 1
      %s188 = scalar_select %p187, %s184, 1
      %s189 = smul.addr %s186, 2
      %s190 = sadd.s32 %s188, %s189
      %s191 = smul.addr %s190, 8
      %s192 = scalar_lea.vmem %s3, %s191
      %s193 = smul.u32 2, %s19
      %s194 = smul.u32 %s19, 16
      %s195 = scalar_lea.vmem %s183, %s194
      %v196 = vld [vmem:[%s195] sm:$0xff]
      %v197 = vld [vmem:[%s195 + $0x8] sm:$0xff]
      %v198 = vld [vmem:[%s1] sm:$0xff]
      %v199 = vld [vmem:[%s1 + $0x8] sm:$0xff]
      %v200 = vld [vmem:[%s1 + $0x10] sm:$0xff]
      %v201 = vld [vmem:[%s1 + $0x18] sm:$0xff]
      %v202 = vld [vmem:[%s1 + $0x20] sm:$0xff]
      %v203 = vld [vmem:[%s1 + $0x28] sm:$0xff]
      %v204 = vld [vmem:[%s1 + $0x30] sm:$0xff]
      %v205 = vld [vmem:[%s1 + $0x38] sm:$0xff]
      %v206 = vld [vmem:[%s1 + $0x40] sm:$0xff]
      %s207 = sadd.s32 %s194, 1
      %s208 = scalar_lea.vmem %s183, %s207
      %v209 = vld [vmem:[%s208] sm:$0xff]
      %v210 = vld [vmem:[%s208 + $0x8] sm:$0xff]
      %s211 = scalar_lea.vmem %s1, 72
      %v212 = vld [vmem:[%s211] sm:$0xff]
      %v213 = vld [vmem:[%s211 + $0x8] sm:$0xff]
      %v214 = vld [vmem:[%s211 + $0x10] sm:$0xff]
      %v215 = vld [vmem:[%s211 + $0x18] sm:$0xff]
      %v216 = vld [vmem:[%s211 + $0x20] sm:$0xff]
      %v217 = vld [vmem:[%s211 + $0x28] sm:$0xff]
      %v218 = vld [vmem:[%s211 + $0x30] sm:$0xff]
      %v219 = vld [vmem:[%s211 + $0x38] sm:$0xff]
      %v220 = vld [vmem:[%s211 + $0x40] sm:$0xff]
      %vm221 = vcmask 588800
      %v223 = vsel %vm221, %v209, 0
      %v226 = vsel %vm221, %v210, 0
      %228 = vmatprep.subr.mxu0 0.0
      %229 = vmatpush1.msra.mxu0 0.0
      %230 = vmatprep.subr.mxu0 0.0
      %231 = vmatpush1.msra.mxu0 0.0
      %232 = vmatprep.subr.mxu0 0.0
      %233 = vmatpush1.msra.mxu0 0.0
      %234 = vmatprep.subr.mxu0 0.0
      %235 = vmatpush1.msra.mxu0 0.0
      %236 = vmatprep.subr.mxu0 0.0
      %237 = vmatpush1.msra.mxu0 0.0
      %238 = vmatprep.subr.mxu0 0.0
      %239 = vmatpush1.msra.mxu0 0.0
      %240 = vmatprep.subr.mxu0 0.0
      %241 = vmatpush1.msra.mxu0 0.0
      %242 = vmatprep.subr.mxu0 0.0
      %243 = vmatpush1.msra.mxu0 %v220
      %244 = vmatprep.subr.mxu0 0.0
      %245 = vmatpush1.msra.mxu0 %v219
      %246 = vmatprep.subr.mxu0 0.0
      %247 = vmatpush1.msra.mxu0 %v218
      %248 = vmatprep.subr.mxu0 0.0
      %249 = vmatpush1.msra.mxu0 %v217
      %250 = vmatprep.subr.mxu0 0.0
      %251 = vmatpush1.msra.mxu0 %v216
      %252 = vmatprep.subr.mxu0 0.0
      %253 = vmatpush1.msra.mxu0 %v215
      %254 = vmatprep.subr.mxu0 0.0
      %255 = vmatpush1.msra.mxu0 %v214
      %256 = vmatprep.subr.mxu0 0.0
      %257 = vmatpush1.msra.mxu0 %v213
      %258 = vmatprep.subr.mxu0 0.0
      %259 = vmatpush1.msra.mxu0 %v212
      %260 = vmatprep.subr.mxu0 0.0
      %261 = vmatpush2.msra.mxu0 0.0
      %262 = vmatprep.subr.mxu0 0.0
      %263 = vmatpush2.msra.mxu0 0.0
      %264 = vmatprep.subr.mxu0 0.0
      %265 = vmatpush2.msra.mxu0 0.0
      %266 = vmatprep.subr.mxu0 0.0
      %267 = vmatpush2.msra.mxu0 0.0
      %268 = vmatprep.subr.mxu0 0.0
      %269 = vmatpush2.msra.mxu0 0.0
      %270 = vmatprep.subr.mxu0 0.0
      %271 = vmatpush2.msra.mxu0 0.0
      %272 = vmatprep.subr.mxu0 0.0
      %273 = vmatpush2.msra.mxu0 0.0
      %274 = vmatprep.subr.mxu0 0.0
      %275 = vmatpush2.msra.mxu0 0.0
      %276 = vmatprep.subr.mxu0 0.0
      %277 = vmatpush2.msra.mxu0 0.0
      %278 = vmatprep.subr.mxu0 0.0
      %279 = vmatpush2.msra.mxu0 0.0
      %280 = vmatprep.subr.mxu0 0.0
      %281 = vmatpush2.msra.mxu0 0.0
      %282 = vmatprep.subr.mxu0 0.0
      %283 = vmatpush2.msra.mxu0 0.0
      %284 = vmatprep.subr.mxu0 0.0
      %285 = vmatpush2.msra.mxu0 0.0
      %286 = vmatprep.subr.mxu0 0.0
      %287 = vmatpush2.msra.mxu0 0.0
      %288 = vmatprep.subr.mxu0 0.0
      %289 = vmatpush2.msra.mxu0 0.0
      %290 = vmatprep.subr.mxu0 0.0
      %291 = vmatpush2.msra.mxu0 0.0
      %292 = vmatprep.mubr.f32.mxu0 0.0
      %293 = vmatmul.mubr.f32.gmra.mxu0 %v223
      %v294 = vpop.f32.mrf.mxu0
      %v295 = vadd.f32 0.0, %v294
      %v296 = vpop.f32.mrf.mxu0
      %297 = vmatprep.mubr.f32.mxu0 0.0
      %298 = vmatmul.mubr.f32.gmra.mxu0 %v226
      %v299 = vpop.f32.mrf.mxu0
      %v300 = vadd.f32 0.0, %v299
      %v301 = vpop.f32.mrf.mxu0
      %302 = vdwg.mxu0
      %v304 = vsel %vm221, %v196, 0
      %v307 = vsel %vm221, %v197, 0
      %309 = vmatprep.subr.mxu0 0.0
      %310 = vmatpush1.msra.mxu0 0.0
      %311 = vmatprep.subr.mxu0 0.0
      %312 = vmatpush1.msra.mxu0 0.0
      %313 = vmatprep.subr.mxu0 0.0
      %314 = vmatpush1.msra.mxu0 0.0
      %315 = vmatprep.subr.mxu0 0.0
      %316 = vmatpush1.msra.mxu0 0.0
      %317 = vmatprep.subr.mxu0 0.0
      %318 = vmatpush1.msra.mxu0 0.0
      %319 = vmatprep.subr.mxu0 0.0
      %320 = vmatpush1.msra.mxu0 0.0
      %321 = vmatprep.subr.mxu0 0.0
      %322 = vmatpush1.msra.mxu0 0.0
      %323 = vmatprep.subr.mxu0 0.0
      %324 = vmatpush1.msra.mxu0 %v206
      %325 = vmatprep.subr.mxu0 0.0
      %326 = vmatpush1.msra.mxu0 %v205
      %327 = vmatprep.subr.mxu0 0.0
      %328 = vmatpush1.msra.mxu0 %v204
      %329 = vmatprep.subr.mxu0 0.0
      %330 = vmatpush1.msra.mxu0 %v203
      %331 = vmatprep.subr.mxu0 0.0
      %332 = vmatpush1.msra.mxu0 %v202
      %333 = vmatprep.subr.mxu0 0.0
      %334 = vmatpush1.msra.mxu0 %v201
      %335 = vmatprep.subr.mxu0 0.0
      %336 = vmatpush1.msra.mxu0 %v200
      %337 = vmatprep.subr.mxu0 0.0
      %338 = vmatpush1.msra.mxu0 %v199
      %339 = vmatprep.subr.mxu0 0.0
      %340 = vmatpush1.msra.mxu0 %v198
      %341 = vmatprep.subr.mxu0 0.0
      %342 = vmatpush2.msra.mxu0 0.0
      %343 = vmatprep.subr.mxu0 0.0
      %344 = vmatpush2.msra.mxu0 0.0
      %345 = vmatprep.subr.mxu0 0.0
      %346 = vmatpush2.msra.mxu0 0.0
      %347 = vmatprep.subr.mxu0 0.0
      %348 = vmatpush2.msra.mxu0 0.0
      %349 = vmatprep.subr.mxu0 0.0
      %350 = vmatpush2.msra.mxu0 0.0
      %351 = vmatprep.subr.mxu0 0.0
      %352 = vmatpush2.msra.mxu0 0.0
      %353 = vmatprep.subr.mxu0 0.0
      %354 = vmatpush2.msra.mxu0 0.0
      %355 = vmatprep.subr.mxu0 0.0
      %356 = vmatpush2.msra.mxu0 0.0
      %357 = vmatprep.subr.mxu0 0.0
      %358 = vmatpush2.msra.mxu0 0.0
      %359 = vmatprep.subr.mxu0 0.0
      %360 = vmatpush2.msra.mxu0 0.0
      %361 = vmatprep.subr.mxu0 0.0
      %362 = vmatpush2.msra.mxu0 0.0
      %363 = vmatprep.subr.mxu0 0.0
      %364 = vmatpush2.msra.mxu0 0.0
      %365 = vmatprep.subr.mxu0 0.0
      %366 = vmatpush2.msra.mxu0 0.0
      %367 = vmatprep.subr.mxu0 0.0
      %368 = vmatpush2.msra.mxu0 0.0
      %369 = vmatprep.subr.mxu0 0.0
      %370 = vmatpush2.msra.mxu0 0.0
      %371 = vmatprep.subr.mxu0 0.0
      %372 = vmatpush2.msra.mxu0 0.0
      %373 = vmatprep.mubr.f32.mxu0 0.0
      %374 = vmatmul.mubr.f32.gmra.mxu0 %v304
      %v375 = vpop.f32.mrf.mxu0
      %v376 = vadd.f32 %v295, %v375
      %v377 = vpop.f32.mrf.mxu0
      %378 = vmatprep.mubr.f32.mxu0 0.0
      %379 = vmatmul.mubr.f32.gmra.mxu0 %v307
      %v380 = vpop.f32.mrf.mxu0
      %v381 = vadd.f32 %v300, %v380
      %v382 = vpop.f32.mrf.mxu0
      %383 = vdwg.mxu0
      %s384 = sadd.s32 %s194, 2
      %s385 = scalar_lea.vmem %s183, %s384
      %v386 = vld [vmem:[%s385] sm:$0xff]
      %v387 = vld [vmem:[%s385 + $0x8] sm:$0xff]
      %s388 = scalar_lea.vmem %s1, 144
      %v389 = vld [vmem:[%s388] sm:$0xff]
      %v390 = vld [vmem:[%s388 + $0x8] sm:$0xff]
      %v391 = vld [vmem:[%s388 + $0x10] sm:$0xff]
      %v392 = vld [vmem:[%s388 + $0x18] sm:$0xff]
      %v393 = vld [vmem:[%s388 + $0x20] sm:$0xff]
      %v394 = vld [vmem:[%s388 + $0x28] sm:$0xff]
      %v395 = vld [vmem:[%s388 + $0x30] sm:$0xff]
      %v396 = vld [vmem:[%s388 + $0x38] sm:$0xff]
      %v397 = vld [vmem:[%s388 + $0x40] sm:$0xff]
      %v399 = vsel %vm221, %v386, 0
      %v402 = vsel %vm221, %v387, 0
      %404 = vmatprep.subr.mxu0 0.0
      %405 = vmatpush1.msra.mxu0 0.0
      %406 = vmatprep.subr.mxu0 0.0
      %407 = vmatpush1.msra.mxu0 0.0
      %408 = vmatprep.subr.mxu0 0.0
      %409 = vmatpush1.msra.mxu0 0.0
      %410 = vmatprep.subr.mxu0 0.0
      %411 = vmatpush1.msra.mxu0 0.0
      %412 = vmatprep.subr.mxu0 0.0
      %413 = vmatpush1.msra.mxu0 0.0
      %414 = vmatprep.subr.mxu0 0.0
      %415 = vmatpush1.msra.mxu0 0.0
      %416 = vmatprep.subr.mxu0 0.0
      %417 = vmatpush1.msra.mxu0 0.0
      %418 = vmatprep.subr.mxu0 0.0
      %419 = vmatpush1.msra.mxu0 %v397
      %420 = vmatprep.subr.mxu0 0.0
      %421 = vmatpush1.msra.mxu0 %v396
      %422 = vmatprep.subr.mxu0 0.0
      %423 = vmatpush1.msra.mxu0 %v395
      %424 = vmatprep.subr.mxu0 0.0
      %425 = vmatpush1.msra.mxu0 %v394
      %426 = vmatprep.subr.mxu0 0.0
      %427 = vmatpush1.msra.mxu0 %v393
      %428 = vmatprep.subr.mxu0 0.0
      %429 = vmatpush1.msra.mxu0 %v392
      %430 = vmatprep.subr.mxu0 0.0
      %431 = vmatpush1.msra.mxu0 %v391
      %432 = vmatprep.subr.mxu0 0.0
      %433 = vmatpush1.msra.mxu0 %v390
      %434 = vmatprep.subr.mxu0 0.0
      %435 = vmatpush1.msra.mxu0 %v389
      %436 = vmatprep.subr.mxu0 0.0
      %437 = vmatpush2.msra.mxu0 0.0
      %438 = vmatprep.subr.mxu0 0.0
      %439 = vmatpush2.msra.mxu0 0.0
      %440 = vmatprep.subr.mxu0 0.0
      %441 = vmatpush2.msra.mxu0 0.0
      %442 = vmatprep.subr.mxu0 0.0
      %443 = vmatpush2.msra.mxu0 0.0
      %444 = vmatprep.subr.mxu0 0.0
      %445 = vmatpush2.msra.mxu0 0.0
      %446 = vmatprep.subr.mxu0 0.0
      %447 = vmatpush2.msra.mxu0 0.0
      %448 = vmatprep.subr.mxu0 0.0
      %449 = vmatpush2.msra.mxu0 0.0
      %450 = vmatprep.subr.mxu0 0.0
      %451 = vmatpush2.msra.mxu0 0.0
      %452 = vmatprep.subr.mxu0 0.0
      %453 = vmatpush2.msra.mxu0 0.0
      %454 = vmatprep.subr.mxu0 0.0
      %455 = vmatpush2.msra.mxu0 0.0
      %456 = vmatprep.subr.mxu0 0.0
      %457 = vmatpush2.msra.mxu0 0.0
      %458 = vmatprep.subr.mxu0 0.0
      %459 = vmatpush2.msra.mxu0 0.0
      %460 = vmatprep.subr.mxu0 0.0
      %461 = vmatpush2.msra.mxu0 0.0
      %462 = vmatprep.subr.mxu0 0.0
      %463 = vmatpush2.msra.mxu0 0.0
      %464 = vmatprep.subr.mxu0 0.0
      %465 = vmatpush2.msra.mxu0 0.0
      %466 = vmatprep.subr.mxu0 0.0
      %467 = vmatpush2.msra.mxu0 0.0
      %468 = vmatprep.mubr.f32.mxu0 0.0
      %469 = vmatmul.mubr.f32.gmra.mxu0 %v399
      %v470 = vpop.f32.mrf.mxu0
      %v471 = vadd.f32 0.0, %v470
      %v472 = vpop.f32.mrf.mxu0
      %473 = vmatprep.mubr.f32.mxu0 0.0
      %474 = vmatmul.mubr.f32.gmra.mxu0 %v402
      %v475 = vpop.f32.mrf.mxu0
      %v476 = vadd.f32 0.0, %v475
      %v477 = vpop.f32.mrf.mxu0
      %478 = vdwg.mxu0
      %v479 = vadd.f32 %v376, %v471
      %v480 = vadd.f32 %v381, %v476
      %v481 = vld [vmem:[%s2] sm:$0x1]
      %v483 = vlaneseq
      %v484 = vshrl.u32 %v483, 7
      %v485 = vsub.s32 0, %v484
      %v486 = vrot.slane %v481, %v485
      %v488 = vadd.f32 %v479, %v486
      %v489 = vadd.f32 %v480, %v486
      %490 = vst [vmem:[%s192] sm:$0xff] %v488
      %491 = vst [vmem:[%s192 + $0x8] sm:$0xff] %v489
      %s492 = smul.u32 2, %s19
      %p493 = scmp.lt.s32.totalorder %s18, 1
      %s494 = scalar_select %p493, %s18, 1
      %p495 = scmp.lt.s32.totalorder %s492, 1
      %s496 = scalar_select %p495, %s492, 1
      %s497 = smul.addr %s494, 2
      %s498 = sadd.s32 %s496, %s497
      %s499 = smul.addr %s498, 8
      %s500 = scalar_lea.vmem %s3, %s499
      // Predicated region
      $region33: #{separable_conv2d.1} parent=31 // pred_check
        %p501 = pneg %p114
      $region34: #{separable_conv2d.1} parent=31 // pred_check_branch
        %503 = sbr.rel (%p501) target = $region36
      $region35: #{separable_conv2d.1} parent=31 // pred_region
        %s504 = smul.u32 2, %s19
      $region36: #{separable_conv2d.1} parent=31 // pred_fallthru
        _
    $region32: #{separable_conv2d.1} parent=5 // pred_fallthru
      _
    %p505 = scmp.le.s32.totalorder 2, %s9
    // Predicated region
    $region37: #{separable_conv2d.1} parent=5 // pred_check
      %p506 = pneg %p505
    $region38: #{separable_conv2d.1} parent=5 // pred_check_branch
      %508 = sbr.rel (%p506) target = $region40
    $region39: #{separable_conv2d.1} parent=5 // pred_region
      %s509 = ssub.s32 %s9, 2
      // Predicated region
      $region41: #{separable_conv2d.1} parent=39 // pred_check
        %p510 = pneg %p120
      $region42: #{separable_conv2d.1} parent=39 // pred_check_branch
        %512 = sbr.rel (%p510) target = $region44
      $region43: #{separable_conv2d.1} parent=39 // pred_region
        %s513 = smul.u32 2, %s21
        %p514 = scmp.lt.s32.totalorder %s20, 1
        %s515 = scalar_select %p514, %s20, 1
        %p516 = scmp.lt.s32.totalorder %s513, 1
        %s517 = scalar_select %p516, %s513, 1
        %s518 = smul.addr %s515, 2
        %s519 = sadd.s32 %s517, %s518
        %s520 = smul.addr %s519, 8
        %s521 = scalar_lea.vmem %s3, %s520
      $region44: #{separable_conv2d.1} parent=39 // pred_fallthru
        _
    $region40: #{separable_conv2d.1} parent=5 // pred_fallthru
      _
  $region6: #{separable_conv2d.1} parent=0 // loop_footer
    %s13 = sadd.s32 1, %s9
  $region7: #{separable_conv2d.1} parent=0 // loop_footer_branch
    %8 = sbr.rel target = $region3
  $region8: #{separable_conv2d.1} parent=0 // loop_exit
    _

</llo_original>
